<compile_context>
chip_gen: v7x
topology: tpu7x:2x2x1
jax: 0.10.0
libtpu: 0.0.40
codegen_flags: <defaults>
</compile_context>

<pallas_src>
import functools
import math

import jax
import jax.numpy as jnp
from jax.experimental import pallas as pl
from jax.experimental.pallas import tpu as pltpu


# --------------------------------------------------------------------------
# Parameter construction (mirrors UniformRoPE.__init__, non-learnable path).
# --------------------------------------------------------------------------
def build_uniform_rope_cos_sin(n_heads, head_dim, min_freq, max_freq,
                               n_zero_freqs, direction_spacing, nh, nw):
    """Reproduces UniformRoPE.__init__'s cos_HWhF / sin_HWhF buffers (f32)."""
    assert head_dim % 2 == 0
    n_freqs = head_dim // 2
    assert 0 <= n_zero_freqs <= n_freqs
    # TODO(synk): direction_spacing=None draws random phases (torch.rand) at
    # init time; only the deterministic default spacing is reproduced here.
    assert direction_spacing is not None
    t = jnp.linspace(0.0, 1.0, n_freqs - n_zero_freqs, dtype=jnp.float32)
    omega_F = jnp.concatenate([
        jnp.zeros((n_zero_freqs,), jnp.float32),
        jnp.float32(min_freq) * (jnp.float32(max_freq / min_freq) ** t),
    ])
    phi_hF = (jnp.arange(n_heads * n_freqs, dtype=jnp.float32)
              .reshape(n_heads, n_freqs) * jnp.float32(direction_spacing))
    directions_hF2 = jnp.stack([jnp.cos(phi_hF), jnp.sin(phi_hF)], axis=-1)
    freqs_hF2 = omega_F[:, None] * directions_hF2                 # (h, F, 2)
    xlim, ylim = math.sqrt(nw / nh), math.sqrt(nh / nw)
    x_HW = jnp.broadcast_to(
        jnp.linspace(-xlim, xlim, nw, dtype=jnp.float32)[None, :], (nh, nw))
    y_HW = jnp.broadcast_to(
        jnp.linspace(-ylim, ylim, nh, dtype=jnp.float32)[:, None], (nh, nw))
    pos_HW2 = jnp.stack([y_HW, x_HW], axis=-1)                    # (nh, nw, 2)
    theta_HWhF = jnp.einsum('hfc,yxc->yxhf', freqs_hF2, pos_HW2)  # (nh,nw,h,F)
    return jnp.cos(theta_HWhF), jnp.sin(theta_HWhF)


# --------------------------------------------------------------------------
# Coefficient tables: two lane-dense (H*W, K_pad) arrays.
# --------------------------------------------------------------------------
def _build_coeff_tables(cos_HWhF, sin_HWhF, k_pad, table_dtype):
    nh, nw, h, f = cos_HWhF.shape
    hw, k = nh * nw, h * 2 * f
    c = jnp.concatenate([cos_HWhF, cos_HWhF], axis=-1).reshape(hw, k)
    s = jnp.concatenate([-sin_HWhF, sin_HWhF], axis=-1).reshape(hw, k)
    if k_pad != k:
        pad = jnp.zeros((hw, k_pad - k), jnp.float32)
        c = jnp.concatenate([c, pad], axis=-1)
        s = jnp.concatenate([s, pad], axis=-1)
    return c.astype(table_dtype), s.astype(table_dtype)


# --------------------------------------------------------------------------
# Kernel: out = v*C + partner(v)*S, partner = other half of the same head.
# --------------------------------------------------------------------------
def _rope_kernel(x_ref, c_ref, s_ref, o_ref, *, half, head_dim):
    # Refs are (rows, K_pad), lane-dense.  Compute in f32 (input.float()).
    v = x_ref[...].astype(jnp.float32)
    k = v.shape[1]
    # partner[j] = v[j + half] on x-half lanes, v[j - half] on y-half lanes.
    # Rolls are XLU ops (free slot here); the where keeps each head's pair
    # together, so there is no cross-head contamination on real lanes.
    lane = jax.lax.broadcasted_iota(jnp.int32, v.shape, dimension=1)
    in_x_half = (lane % head_dim) < half
    partner = jnp.where(in_x_half,
                        pltpu.roll(v, k - half, axis=1),   # v[j + half]
                        pltpu.roll(v, half, axis=1))       # v[j - half]
    out = v * c_ref[...].astype(jnp.float32) + partner * s_ref[...].astype(jnp.float32)
    o_ref[...] = out.astype(o_ref.dtype)                   # .type_as(input)


# --------------------------------------------------------------------------
# Tiling / VMEM budget helpers.
# --------------------------------------------------------------------------
def _vmem_budget_bytes():
    """Scoped-VMEM budget with headroom, per generation (v7x 64 MiB physical)."""
    try:
        cap = pltpu.get_tpu_info().vmem_capacity_bytes
    except Exception:
        cap = 64 << 20                       # worst case (v7x per-TC VMEM)
    return max(32 << 20, min((int(cap) * 3) // 4, 96 << 20))


def _pick_block_rows(hw, k_pad, sublane_mult, target_bytes):
    """~target_bytes f32 per (rows, K_pad) block; rows multiple of the packed
    sublane count, or the full extent (ragged last tile is allowed)."""
    rows = (target_bytes // (4 * k_pad)) // sublane_mult * sublane_mult
    rows = max(sublane_mult, rows)
    return hw if rows >= hw else rows


# --------------------------------------------------------------------------
# Forward wrapper.
# --------------------------------------------------------------------------
def uniform_rope_forward(x_NHWhd, cos_HWhF, sin_HWhF, *, block_rows=None,
                         table_dtype=jnp.float32, alias_input=False):
    """forward: rotate (x, y) = chunk(input, 2, -1) by theta(H, W, head, freq)."""
    n, hgt, wdt, h, d = x_NHWhd.shape
    assert d % 2 == 0
    f = d // 2
    assert cos_HWhF.shape == (hgt, wdt, h, f)
    assert sin_HWhF.shape == (hgt, wdt, h, f)
    hw, k = hgt * wdt, h * d
    k_pad = ((k + 127) // 128) * 128          # lane-dense, unmasked stores

    x_flat = x_NHWhd.reshape(n, hw, k)        # free, contiguous reshape
    if k_pad != k:
        # Zero-padded lanes: rolled pad lanes never feed real output lanes,
        # and padded outputs are sliced off below.
        x_flat = jnp.pad(x_flat, ((0, 0), (0, 0), (0, k_pad - k)))

    c_tab, s_tab = _build_coeff_tables(cos_HWhF, sin_HWhF, k_pad, table_dtype)

    itemsize = jnp.dtype(x_NHWhd.dtype).itemsize
    sublane_mult = 8 * max(1, 4 // itemsize)  # 8 (f32) / 16 (bf16) / 32 (int8)

    vmem_budget = _vmem_budget_bytes()
    # 4 block-spec'd arrays double-buffered + f32 body temporaries ~ 16x block.
    target_bytes = min(4 << 20, vmem_budget // 16)
    max_rows = _pick_block_rows(hw, k_pad, sublane_mult, target_bytes)

    if block_rows is None:
        rows = max_rows
    else:
        rows = max(1, min(int(block_rows), hw))
        if rows < hw:
            rows = max(sublane_mult, rows - rows % sublane_mult)  # (8,128) rule
        rows = min(rows, max(max_rows, sublane_mult))             # VMEM safety

    grid = (pl.cdiv(hw, rows), n)             # spatial tiles outer, batch inner

    io_aliases = {0: 0} if (alias_input and k_pad == k) else {}

    out_flat = pl.pallas_call(
        functools.partial(_rope_kernel, half=f, head_dim=d),
        out_shape=jax.ShapeDtypeStruct((n, hw, k_pad), x_NHWhd.dtype),
        grid_spec=pltpu.PrefetchScalarGridSpec(
            num_scalar_prefetch=0,
            grid=grid,
            in_specs=[
                pl.BlockSpec((None, rows, k_pad), lambda i, b: (b, i, 0)),
                pl.BlockSpec((rows, k_pad), lambda i, b: (i, 0)),
                pl.BlockSpec((rows, k_pad), lambda i, b: (i, 0)),
            ],
            out_specs=pl.BlockSpec((None, rows, k_pad), lambda i, b: (b, i, 0)),
        ),
        compiler_params=pltpu.CompilerParams(
            # Spatial axis parallel (megacore split keeps per-core table reuse
            # across the innermost batch axis); batch axis arbitrary.
            dimension_semantics=("parallel", "arbitrary"),
            vmem_limit_bytes=vmem_budget),
        input_output_aliases=io_aliases,
    )(x_flat, c_tab, s_tab)

    if k_pad != k:
        out_flat = out_flat[..., :k]
    return out_flat.reshape(n, hgt, wdt, h, d)


# --------------------------------------------------------------------------
# Demo + correctness check.
# --------------------------------------------------------------------------
if __name__ == "__main__":
    # Small config consistent with the module (head_dim even, K = h*d = 128).
    n_heads, head_dim = 4, 32
    min_freq, max_freq = 1.0, 10.0
    n_zero_freqs = 0
    direction_spacing = math.pi * (1 - math.sqrt(5))
    nh, nw = 16, 16
    batch = 2

    # Buffers as built in __init__ (non-learnable path).
    # TODO(synk): learnable=True recomputes cos/sin from freqs_hF2 each forward;
    # that recompute is plain-JAX trig in the wrapper and then reuses this kernel.
    cos_HWhF, sin_HWhF = build_uniform_rope_cos_sin(
        n_heads, head_dim, min_freq, max_freq, n_zero_freqs,
        direction_spacing, nh, nw)

    key = jax.random.PRNGKey(0)
    x = jax.random.normal(key, (batch, nh, nw, n_heads, head_dim),
                          dtype=jnp.float32)

    out = uniform_rope_forward(x, cos_HWhF, sin_HWhF)
    out = jax.block_until_ready(out)

    # Plain-JAX reference matching the PyTorch forward exactly.
    f = head_dim // 2
    xh = x[..., :f].astype(jnp.float32)
    yh = x[..., f:].astype(jnp.float32)
    cos_b, sin_b = cos_HWhF[None], sin_HWhF[None]
    ref = jnp.concatenate(
        [xh * cos_b - yh * sin_b, xh * sin_b + yh * cos_b],
        axis=-1).astype(x.dtype)

    assert out.shape == x.shape
    assert out.dtype == x.dtype
    assert jnp.allclose(out, ref, atol=1e-5, rtol=1e-5)
    print("KERNEL_OK")
</pallas_src>

<mosaic_0001>
module attributes {stable_mosaic.version = 11 : i64} {
  func.func @_rope_kernel(%arg0: i32, %arg1: i32, %arg2: memref<1x256x128xf32, #tpu.memory_space<vmem>>, %arg3: memref<256x128xf32, #tpu.memory_space<vmem>>, %arg4: memref<256x128xf32, #tpu.memory_space<vmem>>, %arg5: memref<1x256x128xf32, #tpu.memory_space<vmem>>) attributes {dimension_semantics = [#tpu.dimension_semantics<parallel>, #tpu.dimension_semantics<arbitrary>], iteration_bounds = array<i64: 1, 2>, scalar_prefetch = 0 : i64, scratch_operands = 0 : i64, tpu.core_type = #tpu.core_type<tc>, window_params = [{transform_indices = @transform_0, window_bounds = array<i64: 1, 256, 128>}, {transform_indices = @transform_1, window_bounds = array<i64: 256, 128>}, {transform_indices = @transform_2, window_bounds = array<i64: 256, 128>}, {transform_indices = @transform_3, window_bounds = array<i64: 1, 256, 128>}]} {
    %c0 = arith.constant 0 : index
    %c0_0 = arith.constant 0 : index
    %c0_1 = arith.constant 0 : index
    %0 = vector.load %arg2[%c0, %c0_0, %c0_1] : memref<1x256x128xf32, #tpu.memory_space<vmem>>, vector<1x256x128xf32>
    %1 = vector.shape_cast %0 : vector<1x256x128xf32> to vector<256x128xf32>
    %2 = tpu.iota {dimensions = array<i32: 1>} : vector<256x128xi32>
    %c32_i32 = arith.constant 32 : i32
    %c0_i32 = arith.constant 0 : i32
    %3 = arith.cmpi eq, %c32_i32, %c0_i32 : i32
    %c1_i32 = arith.constant 1 : i32
    %4 = arith.select %3, %c1_i32, %c32_i32 : i32
    %5 = vector.broadcast %4 : i32 to vector<256x128xi32>
    %6 = arith.remsi %2, %5 : vector<256x128xi32>
    %c0_i32_2 = arith.constant 0 : i32
    %7 = vector.broadcast %c0_i32_2 : i32 to vector<256x128xi32>
    %8 = arith.cmpi ne, %6, %7 : vector<256x128xi32>
    %c0_i32_3 = arith.constant 0 : i32
    %9 = vector.broadcast %c0_i32_3 : i32 to vector<256x128xi32>
    %10 = arith.cmpi slt, %6, %9 : vector<256x128xi32>
    %c0_i32_4 = arith.constant 0 : i32
    %11 = arith.cmpi slt, %4, %c0_i32_4 : i32
    %12 = vector.broadcast %11 : i1 to vector<256x128xi1>
    %13 = vector.broadcast %12 : vector<256x128xi1> to vector<256x128xi1>
    %14 = arith.xori %10, %13 : vector<256x128xi1>
    %15 = arith.andi %14, %8 : vector<256x128xi1>
    %16 = vector.broadcast %4 : i32 to vector<256x128xi32>
    %17 = arith.addi %6, %16 : vector<256x128xi32>
    %18 = arith.select %15, %17, %6 : vector<256x128xi1>, vector<256x128xi32>
    %c16_i32 = arith.constant 16 : i32
    %19 = vector.broadcast %c16_i32 : i32 to vector<256x128xi32>
    %20 = arith.cmpi slt, %18, %19 : vector<256x128xi32>
    %c112_i32 = arith.constant 112 : i32
    %21 = tpu.dynamic_rotate %1 by %c112_i32 dim 1 : vector<256x128xf32>, i32 -> vector<256x128xf32>
    %c16_i32_5 = arith.constant 16 : i32
    %22 = tpu.dynamic_rotate %1 by %c16_i32_5 dim 1 : vector<256x128xf32>, i32 -> vector<256x128xf32>
    %23 = arith.select %20, %21, %22 : vector<256x128xi1>, vector<256x128xf32>
    %c0_6 = arith.constant 0 : index
    %c0_7 = arith.constant 0 : index
    %24 = vector.load %arg3[%c0_6, %c0_7] : memref<256x128xf32, #tpu.memory_space<vmem>>, vector<256x128xf32>
    %25 = arith.mulf %1, %24 : vector<256x128xf32>
    %c0_8 = arith.constant 0 : index
    %c0_9 = arith.constant 0 : index
    %26 = vector.load %arg4[%c0_8, %c0_9] : memref<256x128xf32, #tpu.memory_space<vmem>>, vector<256x128xf32>
    %27 = arith.mulf %23, %26 : vector<256x128xf32>
    %28 = arith.addf %25, %27 : vector<256x128xf32>
    %c0_10 = arith.constant 0 : index
    %c0_11 = arith.constant 0 : index
    %c0_12 = arith.constant 0 : index
    %29 = vector.load %arg5[%c0_10, %c0_11, %c0_12] : memref<1x256x128xf32, #tpu.memory_space<vmem>>, vector<1x256x128xf32>
    %30 = vector.shape_cast %29 : vector<1x256x128xf32> to vector<256x128xf32>
    %31 = vector.shape_cast %28 : vector<256x128xf32> to vector<1x256x128xf32>
    tpu.vector_store %arg5[%c0_10, %c0_11, %c0_12], %31 {strides = array<i32>} : memref<1x256x128xf32, #tpu.memory_space<vmem>>, vector<1x256x128xf32>,
    return
  }
  func.func @transform_0(%arg0: i32, %arg1: i32) -> (i32, i32, i32) {
    %c0_i32 = arith.constant 0 : i32
    %c0_i32_0 = arith.constant 0 : i32
    return %arg1, %arg0, %c0_i32 : i32, i32, i32
  }
  func.func @transform_1(%arg0: i32, %arg1: i32) -> (i32, i32) {
    %c0_i32 = arith.constant 0 : i32
    %c0_i32_0 = arith.constant 0 : i32
    return %arg0, %c0_i32 : i32, i32
  }
  func.func @transform_2(%arg0: i32, %arg1: i32) -> (i32, i32) {
    %c0_i32 = arith.constant 0 : i32
    %c0_i32_0 = arith.constant 0 : i32
    return %arg0, %c0_i32 : i32, i32
  }
  func.func @transform_3(%arg0: i32, %arg1: i32) -> (i32, i32, i32) {
    %c0_i32 = arith.constant 0 : i32
    %c0_i32_0 = arith.constant 0 : i32
    return %arg1, %arg0, %c0_i32 : i32, i32, i32
  }
}

</mosaic_0001>

<llo_original>
// kernel: tpu_custom_call.1
$region0: #{tpu_custom_call.1}
  #allocation0 [shape = 'u32[]', space=smem, size = 0x4, offset = 0x4, fixed_abs, tag = 'smem constant byte address 0x4 - core index']
  #allocation1 [shape = 'u32[144,128]{1,0:T(1,128)}', space=vmem, size = 0x12000, scoped, tag = 'internal scratch']
  %s0 = inlined_call_operand.hbm [shape: f32[2,256,128], index: 0, kind: input, shape index: {}]
  %s1 = inlined_call_operand.hbm [shape: f32[256,128], index: 1, kind: input, shape index: {}]
  %s2 = inlined_call_operand.hbm [shape: f32[256,128], index: 2, kind: input, shape index: {}]
  %s3 = inlined_call_operand.hbm [shape: f32[2,256,128], index: 3, kind: output, shape index: {}]
  %s4 = sld [smem:[#allocation0]]
  $region57: #{tpu_custom_call.1} parent=0
    _
  %s6 = ssub.s32 1, %s4
  %s7 = scalar_select 0, %s6, %s4
  $region1: #{tpu_custom_call.1} parent=0
    #allocation2 [shape = 'u8[262144]{0}', space=vmem, size = 0x40000, scoped, tag = 'input window, operand 0']
    #allocation3 [shape = 's32[2]{0}', space=sflag, size = 0x8, scoped, tag = 'scoped memory for tpu_custom_call.1']
    #allocation4 [shape = 's32[2]{0}', space=sflag, size = 0x8, scoped, tag = 'scoped memory for tpu_custom_call.1']
    #allocation5 [shape = 'u8[131072]{0}', space=vmem, size = 0x20000, scoped, tag = 'input window, operand 1, single buffered']
    #allocation6 [shape = 's32[1]{0}', space=sflag, size = 0x4, scoped, tag = 'scoped memory for tpu_custom_call.1']
    #allocation7 [shape = 'u8[131072]{0}', space=vmem, size = 0x20000, scoped, tag = 'input window, operand 2, single buffered']
    #allocation8 [shape = 'u8[262144]{0}', space=vmem, size = 0x40000, scoped, tag = 'output window, operand 0']
    %8 = vsyncpa [#allocation3], 0
    %s9 = scalar_lea.sflag [#allocation3], 1
    %10 = vsyncpa %s9, 0
    %11 = vsyncpa [#allocation6], 0
    %12 = vsyncpa [#allocation4], 0
    %s13 = scalar_lea.sflag [#allocation4], 1
    %14 = vsyncpa %s13, 0
    loop: start=0, step=1, limit=4
    $region2: #{tpu_custom_call.1} parent=1 // loop_pre_header
      _
    $region3: #{tpu_custom_call.1} parent=1 // loop_header
      %s16 = sphi 0, %s20
      %p17 = scmp.ge.s32.totalorder %s16, 4
      %s23 = sphi 0, %s35
      %s24 = sphi 0, %s31
      %s25 = sphi 0, %s23
      %s26 = sphi 0, %s24
      %s27 = sphi 0, %s25
      %s28 = sphi 0, %s26
      %s40 = sphi 0, %s42
      %s43 = sphi 0, %s40
      %s44 = sphi 0, %s43
      %s60 = sphi 0, %s44
      %s66 = sphi 0, %s68
      %s69 = sphi 0, %s66
      %s70 = sphi 0, %s69
      %s86 = sphi 0, %s70
      %s92 = sphi 0, %s94
      %s95 = sphi 0, %s92
      %s96 = sphi 0, %s95
      %s112 = sphi 0, %s96
      %s120 = sphi 0, %s122
      %s123 = sphi 0, %s120
      %s124 = sphi 0, %s123
      %s140 = sphi 0, %s124
    $region4: #{tpu_custom_call.1} parent=1 // loop_header_branch
      %19 = sbr.rel (%p17) target = $region8
    $region5: #{tpu_custom_call.1} parent=1 // loop_body
      %s21 = ssub.s32 %s16, 1
      %s22 = ssub.s32 %s16, 2
      %s29 = sadd.s32 1, %s24
      %p30 = scmp.ge.s32.totalorder %s29, 2
      %s31 = scalar_select %p30, 0, %s29
      %s32 = sadd.s32 1, %s23
      %s33 = scalar_select %p30, %s32, %s23
      %p34 = scmp.ge.s32.totalorder %s33, 1
      %s35 = scalar_select %p34, 0, %s33
      %s36 = ssub.s32 %s24, %s31
      %s37 = ssub.s32 %s23, %s35
      %s38 = sor.u32 %s36, %s37
      %p39 = scmp.eq.s32.totalorder %s38, 0
      %s41 = sadd.s32 %s40, 1
      %s42 = scalar_select %p39, %s40, %s41
      %p45 = pneg %p39
      %p46 = scmp.eq.s32.totalorder %s16, 1
      %p47 = por %p45, %p46
      %p48 = scmp.ne.s32.totalorder %s40, %s43
      %p49 = scmp.eq.s32.totalorder %s16, 0
      %p50 = por %p48, %p49
      %p51 = scmp.ne.s32.totalorder %s40, %s43
      %p52 = scmp.eq.s32.totalorder %s21, 1
      %p53 = por %p51, %p52
      %p54 = scmp.ne.s32.totalorder %s43, %s44
      %p55 = scmp.eq.s32.totalorder %s21, 0
      %p56 = por %p54, %p55
      %p57 = scmp.ne.s32.totalorder %s43, %s44
      %p58 = scmp.eq.s32.totalorder %s22, 1
      %p59 = por %p57, %p58
      %p61 = scmp.ne.s32.totalorder %s44, %s60
      %p62 = scmp.eq.s32.totalorder %s22, 0
      %p63 = por %p61, %p62
      %s64 = ssub.s32 %s23, %s35
      %p65 = scmp.eq.s32.totalorder %s64, 0
      %s67 = sadd.s32 %s66, 1
      %s68 = scalar_select %p65, %s66, %s67
      %p71 = pneg %p65
      %p72 = scmp.eq.s32.totalorder %s16, 1
      %p73 = por %p71, %p72
      %p74 = scmp.ne.s32.totalorder %s66, %s69
      %p75 = scmp.eq.s32.totalorder %s16, 0
      %p76 = por %p74, %p75
      %p77 = scmp.ne.s32.totalorder %s66, %s69
      %p78 = scmp.eq.s32.totalorder %s21, 1
      %p79 = por %p77, %p78
      %p80 = scmp.ne.s32.totalorder %s69, %s70
      %p81 = scmp.eq.s32.totalorder %s21, 0
      %p82 = por %p80, %p81
      %p83 = scmp.ne.s32.totalorder %s69, %s70
      %p84 = scmp.eq.s32.totalorder %s22, 1
      %p85 = por %p83, %p84
      %p87 = scmp.ne.s32.totalorder %s70, %s86
      %p88 = scmp.eq.s32.totalorder %s22, 0
      %p89 = por %p87, %p88
      %s90 = ssub.s32 %s23, %s35
      %p91 = scmp.eq.s32.totalorder %s90, 0
      %s93 = sadd.s32 %s92, 1
      %s94 = scalar_select %p91, %s92, %s93
      %p97 = pneg %p91
      %p98 = scmp.eq.s32.totalorder %s16, 1
      %p99 = por %p97, %p98
      %p100 = scmp.ne.s32.totalorder %s92, %s95
      %p101 = scmp.eq.s32.totalorder %s16, 0
      %p102 = por %p100, %p101
      %p103 = scmp.ne.s32.totalorder %s92, %s95
      %p104 = scmp.eq.s32.totalorder %s21, 1
      %p105 = por %p103, %p104
      %p106 = scmp.ne.s32.totalorder %s95, %s96
      %p107 = scmp.eq.s32.totalorder %s21, 0
      %p108 = por %p106, %p107
      %p109 = scmp.ne.s32.totalorder %s95, %s96
      %p110 = scmp.eq.s32.totalorder %s22, 1
      %p111 = por %p109, %p110
      %p113 = scmp.ne.s32.totalorder %s96, %s112
      %p114 = scmp.eq.s32.totalorder %s22, 0
      %p115 = por %p113, %p114
      %s116 = ssub.s32 %s24, %s31
      %s117 = ssub.s32 %s23, %s35
      %s118 = sor.u32 %s116, %s117
      %p119 = scmp.eq.s32.totalorder %s118, 0
      %s121 = sadd.s32 %s120, 1
      %s122 = scalar_select %p119, %s120, %s121
      %p125 = pneg %p119
      %p126 = scmp.eq.s32.totalorder %s16, 1
      %p127 = por %p125, %p126
      %p128 = scmp.ne.s32.totalorder %s120, %s123
      %p129 = scmp.eq.s32.totalorder %s16, 0
      %p130 = por %p128, %p129
      %p131 = scmp.ne.s32.totalorder %s120, %s123
      %p132 = scmp.eq.s32.totalorder %s21, 1
      %p133 = por %p131, %p132
      %p134 = scmp.ne.s32.totalorder %s123, %s124
      %p135 = scmp.eq.s32.totalorder %s21, 0
      %p136 = por %p134, %p135
      %p137 = scmp.ne.s32.totalorder %s123, %s124
      %p138 = scmp.eq.s32.totalorder %s22, 1
      %p139 = por %p137, %p138
      %p141 = scmp.ne.s32.totalorder %s124, %s140
      %p142 = scmp.eq.s32.totalorder %s22, 0
      %p143 = por %p141, %p142
      %p144 = scmp.le.s32.totalorder 1, %s16
      %p145 = scmp.lt.s32.totalorder %s16, 3
      %p146 = pnand %p144, %p145
      %p147 = pneg %p146
      // Predicated region
      $region9: #{tpu_custom_call.1} parent=5 // pred_check
        _
      $region10: #{tpu_custom_call.1} parent=5 // pred_check_branch
        %149 = sbr.rel (%p146) target = $region12
      $region11: #{tpu_custom_call.1} parent=5 // pred_region
        %s150 = ssub.s32 %s16, 1
        // Predicated region
        $region13: #{tpu_custom_call.1} parent=11 // pred_check
          %p151 = pneg %p82
        $region14: #{tpu_custom_call.1} parent=11 // pred_check_branch
          %153 = sbr.rel (%p151) target = $region16
        $region15: #{tpu_custom_call.1} parent=11 // pred_region
          %s154 = smul.u32 32, %s25
          %s156 = ssub.s32 4096, 4096
          %157 = vsyncadd [#allocation6], %s156
          %s158 = smul.addr %s154, 128
          %s159 = scalar_lea.hbm %s1, %s158
          %s160 = sshll.u32 [#allocation5], 4
          %s161 = int_to_ptr.vmem [resolvable:$true] %s160
          %166 = dma.hbm_to_vmem [thread:$0]  %s159, 4096, %s161, [#allocation6], 128, 128, 8
        $region16: #{tpu_custom_call.1} parent=11 // pred_fallthru
          _
        // Predicated region
        $region17: #{tpu_custom_call.1} parent=11 // pred_check
          %p167 = pneg %p108
        $region18: #{tpu_custom_call.1} parent=11 // pred_check_branch
          %169 = sbr.rel (%p167) target = $region20
        $region19: #{tpu_custom_call.1} parent=11 // pred_region
          %s170 = smul.u32 32, %s25
          %s172 = ssub.s32 4096, 4096
          %173 = vsyncadd [#allocation6], %s172
          %s174 = smul.addr %s170, 128
          %s175 = scalar_lea.hbm %s2, %s174
          %s176 = sshll.u32 [#allocation7], 4
          %s177 = int_to_ptr.vmem [resolvable:$true] %s176
          %182 = dma.hbm_to_vmem [thread:$0]  %s175, 4096, %s177, [#allocation6], 128, 128, 8
        $region20: #{tpu_custom_call.1} parent=11 // pred_fallthru
          _
      $region12: #{tpu_custom_call.1} parent=5 // pred_fallthru
        _
      %p183 = scmp.lt.s32.totalorder %s16, 2
      // Predicated region
      $region21: #{tpu_custom_call.1} parent=5 // pred_check
        %p184 = pneg %p183
      $region22: #{tpu_custom_call.1} parent=5 // pred_check_branch
        %186 = sbr.rel (%p184) target = $region24
      $region23: #{tpu_custom_call.1} parent=5 // pred_region
        // Predicated region
        $region25: #{tpu_custom_call.1} parent=23 // pred_check
          %p187 = pneg %p50
        $region26: #{tpu_custom_call.1} parent=23 // pred_check_branch
          %189 = sbr.rel (%p187) target = $region28
        $region27: #{tpu_custom_call.1} parent=23 // pred_region
          %s190 = sand.u32 %s40, 1
          %s191 = scalar_lea.sflag [#allocation3], %s190
          %s192 = sand.u32 %s40, 1
          %s193 = smul.addr %s192, 256
          %s194 = scalar_lea.vmem [#allocation2], %s193
          %s195 = smul.u32 32, %s23
          %s197 = ssub.s32 4096, 4096
          %198 = vsyncadd %s191, %s197
          %s199 = smul.addr %s24, 32
          %s200 = sadd.s32 %s195, %s199
          %s201 = smul.addr %s200, 128
          %s202 = scalar_lea.hbm %s0, %s201
          %s203 = sshll.u32 %s194, 4
          %s204 = int_to_ptr.vmem [resolvable:$true] %s203
          %209 = dma.hbm_to_vmem [thread:$0]  %s202, 4096, %s204, %s191, 128, 128, 8
        $region28: #{tpu_custom_call.1} parent=23 // pred_fallthru
          _
      $region24: #{tpu_custom_call.1} parent=5 // pred_fallthru
        _
      %p210 = scmp.le.s32.totalorder 1, %s16
      %p211 = scmp.lt.s32.totalorder %s16, 3
      %p212 = pnand %p210, %p211
      %p213 = pneg %p212
      // Predicated region
      $region29: #{tpu_custom_call.1} parent=5 // pred_check
        _
      $region30: #{tpu_custom_call.1} parent=5 // pred_check_branch
        %215 = sbr.rel (%p212) target = $region32
      $region31: #{tpu_custom_call.1} parent=5 // pred_region
        %s216 = ssub.s32 %s16, 1
        %s217 = sand.u32 %s43, 1
        %s218 = scalar_lea.sflag [#allocation3], %s217
        %s219 = sand.u32 %s43, 1
        %s220 = smul.addr %s219, 256
        %s221 = scalar_lea.vmem [#allocation2], %s220
        // Predicated region
        $region33: #{tpu_custom_call.1} parent=31 // pred_check
          %p222 = pneg %p56
        $region34: #{tpu_custom_call.1} parent=31 // pred_check_branch
          %224 = sbr.rel (%p222) target = $region36
        $region35: #{tpu_custom_call.1} parent=31 // pred_region
          %225 = dma.done %s218, 4096
        $region36: #{tpu_custom_call.1} parent=31 // pred_fallthru
          _
        // Predicated region
        $region37: #{tpu_custom_call.1} parent=31 // pred_check
          %p226 = pneg %p82
        $region38: #{tpu_custom_call.1} parent=31 // pred_check_branch
          %228 = sbr.rel (%p226) target = $region40
        $region39: #{tpu_custom_call.1} parent=31 // pred_region
          %229 = dma.done [#allocation6], 4096
        $region40: #{tpu_custom_call.1} parent=31 // pred_fallthru
          _
        // Predicated region
        $region41: #{tpu_custom_call.1} parent=31 // pred_check
          %p230 = pneg %p108
        $region42: #{tpu_custom_call.1} parent=31 // pred_check_branch
          %232 = sbr.rel (%p230) target = $region44
        $region43: #{tpu_custom_call.1} parent=31 // pred_region
          %233 = dma.done [#allocation6], 4096
        $region44: #{tpu_custom_call.1} parent=31 // pred_fallthru
          _
        %s234 = sand.u32 %s43, 1
        %s235 = scalar_lea.sflag [#allocation3], %s234
        %s236 = sand.u32 %s43, 1
        %s237 = smul.addr %s236, 256
        %s238 = scalar_lea.vmem [#allocation2], %s237
        %p239 = pneg %p56
        %p240 = pneg %p53
        %p241 = pneg %p82
        %p242 = pneg %p79
        %p243 = pneg %p108
        %p244 = pneg %p105
        %p245 = pneg %p136
        %p246 = pneg %p133
        %s247 = sand.u32 %s123, 1
        %s248 = scalar_lea.sflag [#allocation4], %s247
        %s249 = sand.u32 %s123, 1
        %s250 = smul.addr %s249, 256
        %s251 = scalar_lea.vmem [#allocation8], %s250
        %s252 = smul.u32 32, %s25
        %s253 = smul.u32 32, %s25
        %s254 = smul.u32 32, %s25
        %s255 = smul.u32 32, %s25
        %v256 = vld [vmem:[%s221] sm:$0xff]
        %v257 = vld [vmem:[%s221 + $0x8] sm:$0xff]
        %v258 = vld [vmem:[%s221 + $0x10] sm:$0xff]
        %v259 = vld [vmem:[%s221 + $0x18] sm:$0xff]
        %v260 = vld [vmem:[%s221 + $0x20] sm:$0xff]
        %v261 = vld [vmem:[%s221 + $0x28] sm:$0xff]
        %v262 = vld [vmem:[%s221 + $0x30] sm:$0xff]
        %v263 = vld [vmem:[%s221 + $0x38] sm:$0xff]
        %v264 = vld [vmem:[%s221 + $0x40] sm:$0xff]
        %v265 = vld [vmem:[%s221 + $0x48] sm:$0xff]
        %v266 = vld [vmem:[%s221 + $0x50] sm:$0xff]
        %v267 = vld [vmem:[%s221 + $0x58] sm:$0xff]
        %v268 = vld [vmem:[%s221 + $0x60] sm:$0xff]
        %v269 = vld [vmem:[%s221 + $0x68] sm:$0xff]
        %v270 = vld [vmem:[%s221 + $0x70] sm:$0xff]
        %v271 = vld [vmem:[%s221 + $0x78] sm:$0xff]
        %v272 = vld [vmem:[%s221 + $0x80] sm:$0xff]
        %v273 = vld [vmem:[%s221 + $0x88] sm:$0xff]
        %v274 = vld [vmem:[%s221 + $0x90] sm:$0xff]
        %v275 = vld [vmem:[%s221 + $0x98] sm:$0xff]
        %v276 = vld [vmem:[%s221 + $0xa0] sm:$0xff]
        %v277 = vld [vmem:[%s221 + $0xa8] sm:$0xff]
        %v278 = vld [vmem:[%s221 + $0xb0] sm:$0xff]
        %v279 = vld [vmem:[%s221 + $0xb8] sm:$0xff]
        %v280 = vld [vmem:[%s221 + $0xc0] sm:$0xff]
        %v281 = vld [vmem:[%s221 + $0xc8] sm:$0xff]
        %v282 = vld [vmem:[%s221 + $0xd0] sm:$0xff]
        %v283 = vld [vmem:[%s221 + $0xd8] sm:$0xff]
        %v284 = vld [vmem:[%s221 + $0xe0] sm:$0xff]
        %v285 = vld [vmem:[%s221 + $0xe8] sm:$0xff]
        %v286 = vld [vmem:[%s221 + $0xf0] sm:$0xff]
        %v287 = vld [vmem:[%s221 + $0xf8] sm:$0xff]
        %v288 = vlaneseq
        %v289 = vand.u32 %v288, 127
        %vm290 = vcmp.lt.s32.totalorder %v289, 0
        %v291 = vsub.s32 0, %v289
        %v292 = vsel %vm290, %v291, %v289
        %v293 = vshrl.u32 %v292, 5
        %v294 = vand.u32 %v292, 31
        %v295 = vsub.s32 0, %v294
        %v296 = vsel %vm290, %v295, %v294
        %vm297 = vcmp.ne.s32.totalorder %v296, 0
        %vm298 = vcmp.lt.s32.totalorder %v296, 0
        %vm299 = vmand %vm298, %vm297
        %v300 = vadd.s32 %v296, 32
        %v301 = vsel %vm299, %v300, %v296
        %vm302 = vcmp.lt.s32.totalorder %v301, 16
        %303 = vrot.lane.b32.xlu0 %v256, 112
        %v304 = vpop.permute.xlu0 %303
        %305 = vrot.lane.b32.xlu0 %v257, 112
        %v306 = vpop.permute.xlu0 %305
        %307 = vrot.lane.b32.xlu0 %v258, 112
        %v308 = vpop.permute.xlu0 %307
        %309 = vrot.lane.b32.xlu0 %v259, 112
        %v310 = vpop.permute.xlu0 %309
        %311 = vrot.lane.b32.xlu0 %v260, 112
        %v312 = vpop.permute.xlu0 %311
        %313 = vrot.lane.b32.xlu0 %v261, 112
        %v314 = vpop.permute.xlu0 %313
        %315 = vrot.lane.b32.xlu0 %v262, 112
        %v316 = vpop.permute.xlu0 %315
        %317 = vrot.lane.b32.xlu0 %v263, 112
        %v318 = vpop.permute.xlu0 %317
        %319 = vrot.lane.b32.xlu0 %v264, 112
        %v320 = vpop.permute.xlu0 %319
        %321 = vrot.lane.b32.xlu0 %v265, 112
        %v322 = vpop.permute.xlu0 %321
        %323 = vrot.lane.b32.xlu0 %v266, 112
        %v324 = vpop.permute.xlu0 %323
        %325 = vrot.lane.b32.xlu0 %v267, 112
        %v326 = vpop.permute.xlu0 %325
        %327 = vrot.lane.b32.xlu0 %v268, 112
        %v328 = vpop.permute.xlu0 %327
        %329 = vrot.lane.b32.xlu0 %v269, 112
        %v330 = vpop.permute.xlu0 %329
        %331 = vrot.lane.b32.xlu0 %v270, 112
        %v332 = vpop.permute.xlu0 %331
        %333 = vrot.lane.b32.xlu0 %v271, 112
        %v334 = vpop.permute.xlu0 %333
        %335 = vrot.lane.b32.xlu0 %v272, 112
        %v336 = vpop.permute.xlu0 %335
        %337 = vrot.lane.b32.xlu0 %v273, 112
        %v338 = vpop.permute.xlu0 %337
        %339 = vrot.lane.b32.xlu0 %v274, 112
        %v340 = vpop.permute.xlu0 %339
        %341 = vrot.lane.b32.xlu0 %v275, 112
        %v342 = vpop.permute.xlu0 %341
        %343 = vrot.lane.b32.xlu0 %v276, 112
        %v344 = vpop.permute.xlu0 %343
        %345 = vrot.lane.b32.xlu0 %v277, 112
        %v346 = vpop.permute.xlu0 %345
        %347 = vrot.lane.b32.xlu0 %v278, 112
        %v348 = vpop.permute.xlu0 %347
        %349 = vrot.lane.b32.xlu0 %v279, 112
        %v350 = vpop.permute.xlu0 %349
        %351 = vrot.lane.b32.xlu0 %v280, 112
        %v352 = vpop.permute.xlu0 %351
        %353 = vrot.lane.b32.xlu0 %v281, 112
        %v354 = vpop.permute.xlu0 %353
        %355 = vrot.lane.b32.xlu0 %v282, 112
        %v356 = vpop.permute.xlu0 %355
        %357 = vrot.lane.b32.xlu0 %v283, 112
        %v358 = vpop.permute.xlu0 %357
        %359 = vrot.lane.b32.xlu0 %v284, 112
        %v360 = vpop.permute.xlu0 %359
        %361 = vrot.lane.b32.xlu0 %v285, 112
        %v362 = vpop.permute.xlu0 %361
        %363 = vrot.lane.b32.xlu0 %v286, 112
        %v364 = vpop.permute.xlu0 %363
        %365 = vrot.lane.b32.xlu0 %v287, 112
        %v366 = vpop.permute.xlu0 %365
        %367 = vrot.lane.b32.xlu0 %v256, 16
        %v368 = vpop.permute.xlu0 %367
        %369 = vrot.lane.b32.xlu0 %v257, 16
        %v370 = vpop.permute.xlu0 %369
        %371 = vrot.lane.b32.xlu0 %v258, 16
        %v372 = vpop.permute.xlu0 %371
        %373 = vrot.lane.b32.xlu0 %v259, 16
        %v374 = vpop.permute.xlu0 %373
        %375 = vrot.lane.b32.xlu0 %v260, 16
        %v376 = vpop.permute.xlu0 %375
        %377 = vrot.lane.b32.xlu0 %v261, 16
        %v378 = vpop.permute.xlu0 %377
        %379 = vrot.lane.b32.xlu0 %v262, 16
        %v380 = vpop.permute.xlu0 %379
        %381 = vrot.lane.b32.xlu0 %v263, 16
        %v382 = vpop.permute.xlu0 %381
        %383 = vrot.lane.b32.xlu0 %v264, 16
        %v384 = vpop.permute.xlu0 %383
        %385 = vrot.lane.b32.xlu0 %v265, 16
        %v386 = vpop.permute.xlu0 %385
        %387 = vrot.lane.b32.xlu0 %v266, 16
        %v388 = vpop.permute.xlu0 %387
        %389 = vrot.lane.b32.xlu0 %v267, 16
        %v390 = vpop.permute.xlu0 %389
        %391 = vrot.lane.b32.xlu0 %v268, 16
        %v392 = vpop.permute.xlu0 %391
        %393 = vrot.lane.b32.xlu0 %v269, 16
        %v394 = vpop.permute.xlu0 %393
        %395 = vrot.lane.b32.xlu0 %v270, 16
        %v396 = vpop.permute.xlu0 %395
        %397 = vrot.lane.b32.xlu0 %v271, 16
        %v398 = vpop.permute.xlu0 %397
        %399 = vrot.lane.b32.xlu0 %v272, 16
        %v400 = vpop.permute.xlu0 %399
        %401 = vrot.lane.b32.xlu0 %v273, 16
        %v402 = vpop.permute.xlu0 %401
        %403 = vrot.lane.b32.xlu0 %v274, 16
        %v404 = vpop.permute.xlu0 %403
        %405 = vrot.lane.b32.xlu0 %v275, 16
        %v406 = vpop.permute.xlu0 %405
        %407 = vrot.lane.b32.xlu0 %v276, 16
        %v408 = vpop.permute.xlu0 %407
        %409 = vrot.lane.b32.xlu0 %v277, 16
        %v410 = vpop.permute.xlu0 %409
        %411 = vrot.lane.b32.xlu0 %v278, 16
        %v412 = vpop.permute.xlu0 %411
        %413 = vrot.lane.b32.xlu0 %v279, 16
        %v414 = vpop.permute.xlu0 %413
        %415 = vrot.lane.b32.xlu0 %v280, 16
        %v416 = vpop.permute.xlu0 %415
        %417 = vrot.lane.b32.xlu0 %v281, 16
        %v418 = vpop.permute.xlu0 %417
        %419 = vrot.lane.b32.xlu0 %v282, 16
        %v420 = vpop.permute.xlu0 %419
        %421 = vrot.lane.b32.xlu0 %v283, 16
        %v422 = vpop.permute.xlu0 %421
        %423 = vrot.lane.b32.xlu0 %v284, 16
        %v424 = vpop.permute.xlu0 %423
        %425 = vrot.lane.b32.xlu0 %v285, 16
        %v426 = vpop.permute.xlu0 %425
        %427 = vrot.lane.b32.xlu0 %v286, 16
        %v428 = vpop.permute.xlu0 %427
        %429 = vrot.lane.b32.xlu0 %v287, 16
        %v430 = vpop.permute.xlu0 %429
        %v431 = vsel %vm302, %v304, %v368
        %v432 = vsel %vm302, %v306, %v370
        %v433 = vsel %vm302, %v308, %v372
        %v434 = vsel %vm302, %v310, %v374
        %v435 = vsel %vm302, %v312, %v376
        %v436 = vsel %vm302, %v314, %v378
        %v437 = vsel %vm302, %v316, %v380
        %v438 = vsel %vm302, %v318, %v382
        %v439 = vsel %vm302, %v320, %v384
        %v440 = vsel %vm302, %v322, %v386
        %v441 = vsel %vm302, %v324, %v388
        %v442 = vsel %vm302, %v326, %v390
        %v443 = vsel %vm302, %v328, %v392
        %v444 = vsel %vm302, %v330, %v394
        %v445 = vsel %vm302, %v332, %v396
        %v446 = vsel %vm302, %v334, %v398
        %v447 = vsel %vm302, %v336, %v400
        %v448 = vsel %vm302, %v338, %v402
        %v449 = vsel %vm302, %v340, %v404
        %v450 = vsel %vm302, %v342, %v406
        %v451 = vsel %vm302, %v344, %v408
        %v452 = vsel %vm302, %v346, %v410
        %v453 = vsel %vm302, %v348, %v412
        %v454 = vsel %vm302, %v350, %v414
        %v455 = vsel %vm302, %v352, %v416
        %v456 = vsel %vm302, %v354, %v418
        %v457 = vsel %vm302, %v356, %v420
        %v458 = vsel %vm302, %v358, %v422
        %v459 = vsel %vm302, %v360, %v424
        %v460 = vsel %vm302, %v362, %v426
        %v461 = vsel %vm302, %v364, %v428
        %v462 = vsel %vm302, %v366, %v430
        %v463 = vld [vmem:[#allocation5] sm:$0xff]
        %v464 = vld [vmem:[#allocation5 + $0x8] sm:$0xff]
        %v465 = vld [vmem:[#allocation5 + $0x10] sm:$0xff]
        %v466 = vld [vmem:[#allocation5 + $0x18] sm:$0xff]
        %v467 = vld [vmem:[#allocation5 + $0x20] sm:$0xff]
        %v468 = vld [vmem:[#allocation5 + $0x28] sm:$0xff]
        %v469 = vld [vmem:[#allocation5 + $0x30] sm:$0xff]
        %v470 = vld [vmem:[#allocation5 + $0x38] sm:$0xff]
        %v471 = vld [vmem:[#allocation5 + $0x40] sm:$0xff]
        %v472 = vld [vmem:[#allocation5 + $0x48] sm:$0xff]
        %v473 = vld [vmem:[#allocation5 + $0x50] sm:$0xff]
        %v474 = vld [vmem:[#allocation5 + $0x58] sm:$0xff]
        %v475 = vld [vmem:[#allocation5 + $0x60] sm:$0xff]
        %v476 = vld [vmem:[#allocation5 + $0x68] sm:$0xff]
        %v477 = vld [vmem:[#allocation5 + $0x70] sm:$0xff]
        %v478 = vld [vmem:[#allocation5 + $0x78] sm:$0xff]
        %v479 = vld [vmem:[#allocation5 + $0x80] sm:$0xff]
        %v480 = vld [vmem:[#allocation5 + $0x88] sm:$0xff]
        %v481 = vld [vmem:[#allocation5 + $0x90] sm:$0xff]
        %v482 = vld [vmem:[#allocation5 + $0x98] sm:$0xff]
        %v483 = vld [vmem:[#allocation5 + $0xa0] sm:$0xff]
        %v484 = vld [vmem:[#allocation5 + $0xa8] sm:$0xff]
        %v485 = vld [vmem:[#allocation5 + $0xb0] sm:$0xff]
        %v486 = vld [vmem:[#allocation5 + $0xb8] sm:$0xff]
        %v487 = vld [vmem:[#allocation5 + $0xc0] sm:$0xff]
        %v488 = vld [vmem:[#allocation5 + $0xc8] sm:$0xff]
        %v489 = vld [vmem:[#allocation5 + $0xd0] sm:$0xff]
        %v490 = vld [vmem:[#allocation5 + $0xd8] sm:$0xff]
        %v491 = vld [vmem:[#allocation5 + $0xe0] sm:$0xff]
        %v492 = vld [vmem:[#allocation5 + $0xe8] sm:$0xff]
        %v493 = vld [vmem:[#allocation5 + $0xf0] sm:$0xff]
        %v494 = vld [vmem:[#allocation5 + $0xf8] sm:$0xff]
        %v495 = vmul.f32 %v256, %v463
        %v496 = vmul.f32 %v257, %v464
        %v497 = vmul.f32 %v258, %v465
        %v498 = vmul.f32 %v259, %v466
        %v499 = vmul.f32 %v260, %v467
        %v500 = vmul.f32 %v261, %v468
        %v501 = vmul.f32 %v262, %v469
        %v502 = vmul.f32 %v263, %v470
        %v503 = vmul.f32 %v264, %v471
        %v504 = vmul.f32 %v265, %v472
        %v505 = vmul.f32 %v266, %v473
        %v506 = vmul.f32 %v267, %v474
        %v507 = vmul.f32 %v268, %v475
        %v508 = vmul.f32 %v269, %v476
        %v509 = vmul.f32 %v270, %v477
        %v510 = vmul.f32 %v271, %v478
        %v511 = vmul.f32 %v272, %v479
        %v512 = vmul.f32 %v273, %v480
        %v513 = vmul.f32 %v274, %v481
        %v514 = vmul.f32 %v275, %v482
        %v515 = vmul.f32 %v276, %v483
        %v516 = vmul.f32 %v277, %v484
        %v517 = vmul.f32 %v278, %v485
        %v518 = vmul.f32 %v279, %v486
        %v519 = vmul.f32 %v280, %v487
        %v520 = vmul.f32 %v281, %v488
        %v521 = vmul.f32 %v282, %v489
        %v522 = vmul.f32 %v283, %v490
        %v523 = vmul.f32 %v284, %v491
        %v524 = vmul.f32 %v285, %v492
        %v525 = vmul.f32 %v286, %v493
        %v526 = vmul.f32 %v287, %v494
        %v527 = vld [vmem:[#allocation7] sm:$0xff]
        %v528 = vld [vmem:[#allocation7 + $0x8] sm:$0xff]
        %v529 = vld [vmem:[#allocation7 + $0x10] sm:$0xff]
        %v530 = vld [vmem:[#allocation7 + $0x18] sm:$0xff]
        %v531 = vld [vmem:[#allocation7 + $0x20] sm:$0xff]
        %v532 = vld [vmem:[#allocation7 + $0x28] sm:$0xff]
        %v533 = vld [vmem:[#allocation7 + $0x30] sm:$0xff]
        %v534 = vld [vmem:[#allocation7 + $0x38] sm:$0xff]
        %v535 = vld [vmem:[#allocation7 + $0x40] sm:$0xff]
        %v536 = vld [vmem:[#allocation7 + $0x48] sm:$0xff]
        %v537 = vld [vmem:[#allocation7 + $0x50] sm:$0xff]
        %v538 = vld [vmem:[#allocation7 + $0x58] sm:$0xff]
        %v539 = vld [vmem:[#allocation7 + $0x60] sm:$0xff]
        %v540 = vld [vmem:[#allocation7 + $0x68] sm:$0xff]
        %v541 = vld [vmem:[#allocation7 + $0x70] sm:$0xff]
        %v542 = vld [vmem:[#allocation7 + $0x78] sm:$0xff]
        %v543 = vld [vmem:[#allocation7 + $0x80] sm:$0xff]
        %v544 = vld [vmem:[#allocation7 + $0x88] sm:$0xff]
        %v545 = vld [vmem:[#allocation7 + $0x90] sm:$0xff]
        %v546 = vld [vmem:[#allocation7 + $0x98] sm:$0xff]
        %v547 = vld [vmem:[#allocation7 + $0xa0] sm:$0xff]
        %v548 = vld [vmem:[#allocation7 + $0xa8] sm:$0xff]
        %v549 = vld [vmem:[#allocation7 + $0xb0] sm:$0xff]
        %v550 = vld [vmem:[#allocation7 + $0xb8] sm:$0xff]
        %v551 = vld [vmem:[#allocation7 + $0xc0] sm:$0xff]
        %v552 = vld [vmem:[#allocation7 + $0xc8] sm:$0xff]
        %v553 = vld [vmem:[#allocation7 + $0xd0] sm:$0xff]
        %v554 = vld [vmem:[#allocation7 + $0xd8] sm:$0xff]
        %v555 = vld [vmem:[#allocation7 + $0xe0] sm:$0xff]
        %v556 = vld [vmem:[#allocation7 + $0xe8] sm:$0xff]
        %v557 = vld [vmem:[#allocation7 + $0xf0] sm:$0xff]
        %v558 = vld [vmem:[#allocation7 + $0xf8] sm:$0xff]
        %v559 = vmul.f32 %v431, %v527
        %v560 = vmul.f32 %v432, %v528
        %v561 = vmul.f32 %v433, %v529
        %v562 = vmul.f32 %v434, %v530
        %v563 = vmul.f32 %v435, %v531
        %v564 = vmul.f32 %v436, %v532
        %v565 = vmul.f32 %v437, %v533
        %v566 = vmul.f32 %v438, %v534
        %v567 = vmul.f32 %v439, %v535
        %v568 = vmul.f32 %v440, %v536
        %v569 = vmul.f32 %v441, %v537
        %v570 = vmul.f32 %v442, %v538
        %v571 = vmul.f32 %v443, %v539
        %v572 = vmul.f32 %v444, %v540
        %v573 = vmul.f32 %v445, %v541
        %v574 = vmul.f32 %v446, %v542
        %v575 = vmul.f32 %v447, %v543
        %v576 = vmul.f32 %v448, %v544
        %v577 = vmul.f32 %v449, %v545
        %v578 = vmul.f32 %v450, %v546
        %v579 = vmul.f32 %v451, %v547
        %v580 = vmul.f32 %v452, %v548
        %v581 = vmul.f32 %v453, %v549
        %v582 = vmul.f32 %v454, %v550
        %v583 = vmul.f32 %v455, %v551
        %v584 = vmul.f32 %v456, %v552
        %v585 = vmul.f32 %v457, %v553
        %v586 = vmul.f32 %v458, %v554
        %v587 = vmul.f32 %v459, %v555
        %v588 = vmul.f32 %v460, %v556
        %v589 = vmul.f32 %v461, %v557
        %v590 = vmul.f32 %v462, %v558
        %v591 = vadd.f32 %v495, %v559
        %v592 = vadd.f32 %v496, %v560
        %v593 = vadd.f32 %v497, %v561
        %v594 = vadd.f32 %v498, %v562
        %v595 = vadd.f32 %v499, %v563
        %v596 = vadd.f32 %v500, %v564
        %v597 = vadd.f32 %v501, %v565
        %v598 = vadd.f32 %v502, %v566
        %v599 = vadd.f32 %v503, %v567
        %v600 = vadd.f32 %v504, %v568
        %v601 = vadd.f32 %v505, %v569
        %v602 = vadd.f32 %v506, %v570
        %v603 = vadd.f32 %v507, %v571
        %v604 = vadd.f32 %v508, %v572
        %v605 = vadd.f32 %v509, %v573
        %v606 = vadd.f32 %v510, %v574
        %v607 = vadd.f32 %v511, %v575
        %v608 = vadd.f32 %v512, %v576
        %v609 = vadd.f32 %v513, %v577
        %v610 = vadd.f32 %v514, %v578
        %v611 = vadd.f32 %v515, %v579
        %v612 = vadd.f32 %v516, %v580
        %v613 = vadd.f32 %v517, %v581
        %v614 = vadd.f32 %v518, %v582
        %v615 = vadd.f32 %v519, %v583
        %v616 = vadd.f32 %v520, %v584
        %v617 = vadd.f32 %v521, %v585
        %v618 = vadd.f32 %v522, %v586
        %v619 = vadd.f32 %v523, %v587
        %v620 = vadd.f32 %v524, %v588
        %v621 = vadd.f32 %v525, %v589
        %v622 = vadd.f32 %v526, %v590
        %623 = vst [vmem:[%s251] sm:$0xff] %v591
        %624 = vst [vmem:[%s251 + $0x8] sm:$0xff] %v592
        %625 = vst [vmem:[%s251 + $0x10] sm:$0xff] %v593
        %626 = vst [vmem:[%s251 + $0x18] sm:$0xff] %v594
        %627 = vst [vmem:[%s251 + $0x20] sm:$0xff] %v595
        %628 = vst [vmem:[%s251 + $0x28] sm:$0xff] %v596
        %629 = vst [vmem:[%s251 + $0x30] sm:$0xff] %v597
        %630 = vst [vmem:[%s251 + $0x38] sm:$0xff] %v598
        %631 = vst [vmem:[%s251 + $0x40] sm:$0xff] %v599
        %632 = vst [vmem:[%s251 + $0x48] sm:$0xff] %v600
        %633 = vst [vmem:[%s251 + $0x50] sm:$0xff] %v601
        %634 = vst [vmem:[%s251 + $0x58] sm:$0xff] %v602
        %635 = vst [vmem:[%s251 + $0x60] sm:$0xff] %v603
        %636 = vst [vmem:[%s251 + $0x68] sm:$0xff] %v604
        %637 = vst [vmem:[%s251 + $0x70] sm:$0xff] %v605
        %638 = vst [vmem:[%s251 + $0x78] sm:$0xff] %v606
        %639 = vst [vmem:[%s251 + $0x80] sm:$0xff] %v607
        %640 = vst [vmem:[%s251 + $0x88] sm:$0xff] %v608
        %641 = vst [vmem:[%s251 + $0x90] sm:$0xff] %v609
        %642 = vst [vmem:[%s251 + $0x98] sm:$0xff] %v610
        %643 = vst [vmem:[%s251 + $0xa0] sm:$0xff] %v611
        %644 = vst [vmem:[%s251 + $0xa8] sm:$0xff] %v612
        %645 = vst [vmem:[%s251 + $0xb0] sm:$0xff] %v613
        %646 = vst [vmem:[%s251 + $0xb8] sm:$0xff] %v614
        %647 = vst [vmem:[%s251 + $0xc0] sm:$0xff] %v615
        %648 = vst [vmem:[%s251 + $0xc8] sm:$0xff] %v616
        %649 = vst [vmem:[%s251 + $0xd0] sm:$0xff] %v617
        %650 = vst [vmem:[%s251 + $0xd8] sm:$0xff] %v618
        %651 = vst [vmem:[%s251 + $0xe0] sm:$0xff] %v619
        %652 = vst [vmem:[%s251 + $0xe8] sm:$0xff] %v620
        %653 = vst [vmem:[%s251 + $0xf0] sm:$0xff] %v621
        %654 = vst [vmem:[%s251 + $0xf8] sm:$0xff] %v622
        %s655 = sand.u32 %s123, 1
        %s656 = scalar_lea.sflag [#allocation4], %s655
        %s657 = sand.u32 %s123, 1
        %s658 = smul.addr %s657, 256
        %s659 = scalar_lea.vmem [#allocation8], %s658
        // Predicated region
        $region45: #{tpu_custom_call.1} parent=31 // pred_check
          %p660 = pneg %p133
        $region46: #{tpu_custom_call.1} parent=31 // pred_check_branch
          %662 = sbr.rel (%p660) target = $region48
        $region47: #{tpu_custom_call.1} parent=31 // pred_region
          %s663 = smul.u32 32, %s25
          %s665 = ssub.s32 4096, 4096
          %666 = vsyncadd %s656, %s665
          %s667 = smul.addr %s26, 32
          %s668 = sadd.s32 %s663, %s667
          %s669 = smul.addr %s668, 128
          %s670 = scalar_lea.hbm %s3, %s669
          %s671 = sshll.u32 %s659, 4
          %s672 = int_to_ptr.vmem [resolvable:$true] %s671
          %677 = dma.vmem_to_hbm [thread:$0]  %s672, 4096, %s670, %s656, 128, 128, 8
        $region48: #{tpu_custom_call.1} parent=31 // pred_fallthru
          _
      $region32: #{tpu_custom_call.1} parent=5 // pred_fallthru
        _
      %p678 = scmp.le.s32.totalorder 2, %s16
      // Predicated region
      $region49: #{tpu_custom_call.1} parent=5 // pred_check
        %p679 = pneg %p678
      $region50: #{tpu_custom_call.1} parent=5 // pred_check_branch
        %681 = sbr.rel (%p679) target = $region52
      $region51: #{tpu_custom_call.1} parent=5 // pred_region
        %s682 = ssub.s32 %s16, 2
        // Predicated region
        $region53: #{tpu_custom_call.1} parent=51 // pred_check
          %p683 = pneg %p139
        $region54: #{tpu_custom_call.1} parent=51 // pred_check_branch
          %685 = sbr.rel (%p683) target = $region56
        $region55: #{tpu_custom_call.1} parent=51 // pred_region
          %s686 = sand.u32 %s124, 1
          %s687 = scalar_lea.sflag [#allocation4], %s686
          %s688 = sand.u32 %s124, 1
          %s689 = smul.addr %s688, 256
          %s690 = scalar_lea.vmem [#allocation8], %s689
          %691 = dma.done %s687, 4096
        $region56: #{tpu_custom_call.1} parent=51 // pred_fallthru
          _
      $region52: #{tpu_custom_call.1} parent=5 // pred_fallthru
        _
    $region6: #{tpu_custom_call.1} parent=1 // loop_footer
      %s20 = sadd.s32 1, %s16
    $region7: #{tpu_custom_call.1} parent=1 // loop_footer_branch
      %15 = sbr.rel target = $region3
    $region8: #{tpu_custom_call.1} parent=1 // loop_exit
      _
    %692 = vsyncpa [#allocation3], 1
    %s693 = scalar_lea.sflag [#allocation3], 1
    %694 = vsyncpa %s693, 1
    %695 = vsyncpa [#allocation6], 1
    %696 = vsyncpa [#allocation4], 1
    %s697 = scalar_lea.sflag [#allocation4], 1
    %698 = vsyncpa %s697, 1

</llo_original>
